<compile_context>
chip_gen: v5e
topology: v5e:2x2
jax: 0.10.0
libtpu: 0.0.40
codegen_flags: <defaults>
</compile_context>

<pallas_src>
import jax
import jax.numpy as jnp
from jax import lax
from jax.experimental import pallas as pl
from jax.experimental.pallas import tpu as pltpu

EPS = 1e-5


def _round_up(x: int, m: int) -> int:
    return ((x + m - 1) // m) * m


def edge_glam_kernel(x_ref, w1_ref, b1_ref, w2t_ref, b2_ref, o_ref):
    # Linear1 (BatchNorm pre-folded into W1/b1 by the wrapper) + ReLU.
    # (TILE_N, F_IN) @ (F_IN, H) -> (TILE_N, H), f32 MXU accumulate.
    h = jnp.dot(x_ref[...], w1_ref[...], preferred_element_type=jnp.float32)
    h = jnp.maximum(h + b1_ref[...], 0.0)

    # Linear2 emitted transposed so the store is lane-dense:
    # (F_OUT, H) x (TILE_N, H) contracted on H -> (F_OUT, TILE_N)
    # (same NT dot_general pattern as q @ k^T in flash attention).
    logits = lax.dot_general(
        w2t_ref[...], h, (((1,), (1,)), ((), ())),
        preferred_element_type=jnp.float32,
    ) + b2_ref[...]                                   # (F_OUT, TILE_N)

    # Sigmoid (exp goes to the EUP slot; kernel is memory-bound anyway).
    o_ref[...] = 1.0 / (1.0 + jnp.exp(-logits))


def edge_glam_forward(x, gamma, beta, w1, b1, w2, b2, *, tile_n=2048):
    """Fused EdgeGLAM forward. Returns sigmoid(logits) with torch.squeeze(.,1) semantics."""
    n, f_in = x.shape
    hdim = w1.shape[1]
    f_out = w2.shape[1]

    xf = x.astype(jnp.float32)

    # ---- Pass 1: BatchNorm batch statistics over the *true* N (pure
    # bandwidth-bound reduce; plain XLA), then fold BN affine into Linear1. ----
    mean = jnp.mean(xf, axis=0)                               # (F_IN,)
    var = jnp.mean(jnp.square(xf - mean), axis=0)             # biased (training mode)
    inv_std = lax.rsqrt(var + EPS)
    scale = gamma.astype(jnp.float32) * inv_std               # (F_IN,)
    shift = beta.astype(jnp.float32) - mean * scale           # (F_IN,)
    #  BN(x) @ W1 + b1  ==  x @ (scale[:,None]*W1) + (b1 + shift @ W1)
    w1_eff = (scale[:, None] * w1.astype(jnp.float32))        # (F_IN, H)
    b1_eff = (b1.astype(jnp.float32) + shift @ w1.astype(jnp.float32)).reshape(1, hdim)

    w2t = jnp.transpose(w2.astype(jnp.float32))               # (F_OUT, H)
    b2c = b2.astype(jnp.float32).reshape(f_out, 1)            # (F_OUT, 1)

    # ---- Pass 2: tiled streaming kernel over the edge axis. ----
    # TILE_N multiple of 128 (lane-dense transposed output) and >= 8 (sublane
    # tiling on the x block); pad N with zero rows (stats already used true N,
    # padded rows produce garbage that is sliced off below).
    tile_n = max(128, min(int(tile_n), _round_up(n, 128)))
    tile_n = _round_up(tile_n, 128)
    n_pad = _round_up(n, tile_n)
    if n_pad != n:
        xf = jnp.pad(xf, ((0, n_pad - n), (0, 0)))

    grid = (n_pad // tile_n,)
    flops = 2 * n_pad * (f_in * hdim + hdim * f_out)
    bytes_accessed = 4 * (n_pad * f_in + f_in * hdim + hdim * f_out
                          + hdim + f_out + n_pad * f_out)

    out_t = pl.pallas_call(
        edge_glam_kernel,
        out_shape=jax.ShapeDtypeStruct((f_out, n_pad), jnp.float32),
        grid=grid,
        in_specs=[
            pl.BlockSpec((tile_n, f_in), lambda i: (i, 0)),    # x tile (streamed)
            pl.BlockSpec((f_in, hdim), lambda i: (0, 0)),      # W1_eff (resident)
            pl.BlockSpec((1, hdim), lambda i: (0, 0)),         # b1_eff (resident)
            pl.BlockSpec((f_out, hdim), lambda i: (0, 0)),     # W2^T   (resident)
            pl.BlockSpec((f_out, 1), lambda i: (0, 0)),        # b2     (resident)
        ],
        out_specs=pl.BlockSpec((f_out, tile_n), lambda i: (0, i)),  # lane-dense
        compiler_params=pltpu.CompilerParams(
            dimension_semantics=("parallel",)),                # megacore on v7x
        cost_estimate=pl.CostEstimate(
            flops=flops,
            transcendentals=n_pad * f_out,
            bytes_accessed=bytes_accessed),
    )(xf, w1_eff, b1_eff, w2t, b2c)

    out_t = out_t[:, :n]                      # drop padded rows
    if f_out == 1:
        return out_t.reshape(n)               # torch.squeeze(h, 1): (N,1) -> (N,)
    return jnp.transpose(out_t)               # squeeze(1) is a no-op for F_OUT > 1


def make_params(key, f_in, hdim, f_out):
    """Deterministic synthetic parameters (PyTorch-style init ranges)."""
    k1, k2, k3, k4 = jax.random.split(key, 4)
    gamma = jnp.ones((f_in,), jnp.float32)    # BatchNorm affine defaults
    beta = jnp.zeros((f_in,), jnp.float32)
    lim1 = 1.0 / (f_in ** 0.5)
    w1 = jax.random.uniform(k1, (f_in, hdim), jnp.float32, -lim1, lim1)
    b1 = jax.random.uniform(k2, (hdim,), jnp.float32, -lim1, lim1)
    lim2 = 1.0 / (hdim ** 0.5)
    w2 = jax.random.uniform(k3, (hdim, f_out), jnp.float32, -lim2, lim2)
    b2 = jax.random.uniform(k4, (f_out,), jnp.float32, -lim2, lim2)
    return gamma, beta, w1, b1, w2, b2


def reference_forward(x, gamma, beta, w1, b1, w2, b2):
    """Pure-JAX reference (explicit BatchNorm, training-mode batch stats)."""
    mean = jnp.mean(x, axis=0, keepdims=True)
    var = jnp.mean((x - mean) ** 2, axis=0, keepdims=True)
    xn = (x - mean) / jnp.sqrt(var + EPS) * gamma + beta
    h = jnp.maximum(xn @ w1 + b1, 0.0)
    out = jax.nn.sigmoid(h @ w2 + b2)
    if out.shape[1] == 1:
        out = jnp.squeeze(out, axis=1)
    return out


if __name__ == "__main__":
    # Shapes consistent with the module: N edges, input_=32, h=[64], output_=1.
    F_IN, H, F_OUT = 32, 64, 1
    key = jax.random.PRNGKey(0)
    kx1, kx2, kp = jax.random.split(key, 3)
    gamma, beta, w1, b1, w2, b2 = make_params(kp, F_IN, H, F_OUT)

    # Case 1: tiny N (single tile, padded to 128 rows).
    x1 = jax.random.normal(kx1, (16, F_IN), jnp.float32)
    out1 = jax.block_until_ready(edge_glam_forward(x1, gamma, beta, w1, b1, w2, b2))
    ref1 = reference_forward(x1, gamma, beta, w1, b1, w2, b2)
    assert out1.shape == (16,), out1.shape
    assert jnp.allclose(out1, ref1, atol=2e-5, rtol=2e-5), "mismatch (N=16)"

    # Case 2: ragged N with multiple tiles (exercises grid pipelining + tail padding).
    x2 = jax.random.normal(kx2, (300, F_IN), jnp.float32)
    out2 = jax.block_until_ready(
        edge_glam_forward(x2, gamma, beta, w1, b1, w2, b2, tile_n=128))
    ref2 = reference_forward(x2, gamma, beta, w1, b1, w2, b2)
    assert out2.shape == (300,), out2.shape
    assert jnp.allclose(out2, ref2, atol=2e-5, rtol=2e-5), "mismatch (N=300)"

    print("KERNEL_OK")
</pallas_src>

<mosaic_0001>
module attributes {stable_mosaic.version = 11 : i64} {
  func.func @edge_glam_kernel(%arg0: i32, %arg1: memref<128x32xf32, #tpu.memory_space<vmem>>, %arg2: memref<32x64xf32, #tpu.memory_space<vmem>>, %arg3: memref<1x64xf32, #tpu.memory_space<vmem>>, %arg4: memref<1x64xf32, #tpu.memory_space<vmem>>, %arg5: memref<1x1xf32, #tpu.memory_space<vmem>>, %arg6: memref<1x128xf32, #tpu.memory_space<vmem>>) attributes {dimension_semantics = [#tpu.dimension_semantics<parallel>], iteration_bounds = array<i64: 1>, scalar_prefetch = 0 : i64, scratch_operands = 0 : i64, tpu.core_type = #tpu.core_type<tc>, window_params = [{transform_indices = @transform_0, window_bounds = array<i64: 128, 32>}, {pipeline_mode = #tpu.pipeline_mode<synchronous>, transform_indices = @transform_1, window_bounds = array<i64: 32, 64>}, {pipeline_mode = #tpu.pipeline_mode<synchronous>, transform_indices = @transform_2, window_bounds = array<i64: 1, 64>}, {pipeline_mode = #tpu.pipeline_mode<synchronous>, transform_indices = @transform_3, window_bounds = array<i64: 1, 64>}, {pipeline_mode = #tpu.pipeline_mode<synchronous>, transform_indices = @transform_4, window_bounds = array<i64: 1, 1>}, {transform_indices = @transform_5, window_bounds = array<i64: 1, 128>}]} {
    %c0 = arith.constant 0 : index
    %c0_0 = arith.constant 0 : index
    %0 = vector.load %arg1[%c0, %c0_0] : memref<128x32xf32, #tpu.memory_space<vmem>>, vector<128x32xf32>
    %c0_1 = arith.constant 0 : index
    %c0_2 = arith.constant 0 : index
    %1 = vector.load %arg2[%c0_1, %c0_2] : memref<32x64xf32, #tpu.memory_space<vmem>>, vector<32x64xf32>
    %cst = arith.constant dense<0.000000e+00> : vector<128x64xf32>
    %2 = tpu.matmul %0, %1, %cst {dimension_numbers = #tpu.dot_dimension_numbers<[1], [0], [0], [1], [0, 0, 1, 1], [], []>} : vector<128x32xf32>, vector<32x64xf32>, vector<128x64xf32> -> vector<128x64xf32>
    %c0_3 = arith.constant 0 : index
    %c0_4 = arith.constant 0 : index
    %3 = vector.load %arg3[%c0_3, %c0_4] : memref<1x64xf32, #tpu.memory_space<vmem>>, vector<1x64xf32>
    %4 = vector.broadcast %3 : vector<1x64xf32> to vector<128x64xf32>
    %5 = arith.addf %2, %4 : vector<128x64xf32>
    %cst_5 = arith.constant 0.000000e+00 : f32
    %6 = vector.broadcast %cst_5 : f32 to vector<128x64xf32>
    %7 = arith.maximumf %5, %6 : vector<128x64xf32>
    %c0_6 = arith.constant 0 : index
    %c0_7 = arith.constant 0 : index
    %8 = vector.load %arg4[%c0_6, %c0_7] : memref<1x64xf32, #tpu.memory_space<vmem>>, vector<1x64xf32>
    %cst_8 = arith.constant dense<0.000000e+00> : vector<1x128xf32>
    %9 = tpu.matmul %8, %7, %cst_8 {dimension_numbers = #tpu.dot_dimension_numbers<[1], [1], [0], [0], [0, 0, 1, 0], [], []>} : vector<1x64xf32>, vector<128x64xf32>, vector<1x128xf32> -> vector<1x128xf32>
    %c0_9 = arith.constant 0 : index
    %c0_10 = arith.constant 0 : index
    %10 = vector.load %arg5[%c0_9, %c0_10] : memref<1x1xf32, #tpu.memory_space<vmem>>, vector<1x1xf32>
    %11 = vector.broadcast %10 : vector<1x1xf32> to vector<1x128xf32>
    %12 = arith.addf %9, %11 : vector<1x128xf32>
    %cst_11 = arith.constant 0.000000e+00 : f32
    %13 = vector.broadcast %cst_11 : f32 to vector<1x128xf32>
    %14 = arith.subf %13, %12 : vector<1x128xf32>
    %15 = math.exp %14 : vector<1x128xf32>
    %cst_12 = arith.constant 1.000000e+00 : f32
    %16 = vector.broadcast %cst_12 : f32 to vector<1x128xf32>
    %17 = arith.addf %16, %15 : vector<1x128xf32>
    %cst_13 = arith.constant 1.000000e+00 : f32
    %18 = vector.broadcast %cst_13 : f32 to vector<1x128xf32>
    %19 = arith.divf %18, %17 : vector<1x128xf32>
    %c0_14 = arith.constant 0 : index
    %c0_15 = arith.constant 0 : index
    %20 = vector.load %arg6[%c0_14, %c0_15] : memref<1x128xf32, #tpu.memory_space<vmem>>, vector<1x128xf32>
    tpu.vector_store %arg6[%c0_14, %c0_15], %19 {strides = array<i32>} : memref<1x128xf32, #tpu.memory_space<vmem>>, vector<1x128xf32>,
    return
  }
  func.func @transform_0(%arg0: i32) -> (i32, i32) {
    %c0_i32 = arith.constant 0 : i32
    %c0_i32_0 = arith.constant 0 : i32
    return %arg0, %c0_i32 : i32, i32
  }
  func.func @transform_1(%arg0: i32) -> (i32, i32) {
    %c0_i32 = arith.constant 0 : i32
    %c0_i32_0 = arith.constant 0 : i32
    %c0_i32_1 = arith.constant 0 : i32
    return %c0_i32, %c0_i32_0 : i32, i32
  }
  func.func @transform_2(%arg0: i32) -> (i32, i32) {
    %c0_i32 = arith.constant 0 : i32
    %c0_i32_0 = arith.constant 0 : i32
    %c0_i32_1 = arith.constant 0 : i32
    return %c0_i32, %c0_i32_0 : i32, i32
  }
  func.func @transform_3(%arg0: i32) -> (i32, i32) {
    %c0_i32 = arith.constant 0 : i32
    %c0_i32_0 = arith.constant 0 : i32
    %c0_i32_1 = arith.constant 0 : i32
    return %c0_i32, %c0_i32_0 : i32, i32
  }
  func.func @transform_4(%arg0: i32) -> (i32, i32) {
    %c0_i32 = arith.constant 0 : i32
    %c0_i32_0 = arith.constant 0 : i32
    %c0_i32_1 = arith.constant 0 : i32
    return %c0_i32, %c0_i32_0 : i32, i32
  }
  func.func @transform_5(%arg0: i32) -> (i32, i32) {
    %c0_i32 = arith.constant 0 : i32
    %c0_i32_0 = arith.constant 0 : i32
    return %c0_i32, %arg0 : i32, i32
  }
}

</mosaic_0001>

<llo_original>
// kernel: tpu_custom_call.1
$region0: #{tpu_custom_call.1}
  #allocation0 [shape = 'u32[]', space=smem, size = 0x4, offset = 0x4, fixed_abs, tag = 'smem constant byte address 0x4 - core index']
  #allocation1 [shape = 'u32[72,128]{1,0:T(1,128)}', space=vmem, size = 0x9000, scoped, tag = 'internal scratch']
  #allocation2 [shape = 'f32[1,1]{1,0:T(1,128)S(1)}', space=vmem, size = 0x200, scoped, tag = 'scoped memory for tpu_custom_call.1']
  %s0 = inlined_call_operand.vmem [shape: f32[128,32], index: 0, kind: input, shape index: {}]
  %s1 = inlined_call_operand.vmem [shape: f32[32,64], index: 1, kind: input, shape index: {}]
  %s2 = inlined_call_operand.vmem [shape: f32[1,64], index: 2, kind: input, shape index: {}]
  %s3 = inlined_call_operand.vmem [shape: f32[1,64], index: 3, kind: input, shape index: {}]
  %s4 = inlined_call_operand.<no memory space> [shape: f32[1,1], index: 4, kind: input, shape index: {}]
  %s5 = inlined_call_operand.hbm [shape: f32[1,128], index: 5, kind: output, shape index: {}]
  %s6 = sld [smem:[#allocation0]]
  $region30: #{tpu_custom_call.1} parent=0
    _
  %s8 = ssub.s32 1, %s6
  %s9 = scalar_select 0, %s8, %s6
  %v10 = vstv %s4
  %11 = vst [vmem:[#allocation2] sm:$0x1] %v10
  $region1: #{tpu_custom_call.1} parent=0
    #allocation3 [shape = 'u8[512]{0}', space=vmem, size = 0x400, scoped, tag = 'output window, operand 0, single buffered']
    #allocation4 [shape = 's32[1]{0}', space=sflag, size = 0x4, scoped, tag = 'scoped memory for tpu_custom_call.1']
    %12 = vsyncpa [#allocation4], 0
    // Predicated region
    $region2: #{tpu_custom_call.1} parent=1 // pred_check
      _
    $region3: #{tpu_custom_call.1} parent=1 // pred_check_branch
      %14 = sbr.rel (0) target = $region5
    $region4: #{tpu_custom_call.1} parent=1 // pred_region
      _
    $region5: #{tpu_custom_call.1} parent=1 // pred_fallthru
      _
    // Predicated region
    $region6: #{tpu_custom_call.1} parent=1 // pred_check
      _
    $region7: #{tpu_custom_call.1} parent=1 // pred_check_branch
      %16 = sbr.rel (0) target = $region9
    $region8: #{tpu_custom_call.1} parent=1 // pred_region
      _
    $region9: #{tpu_custom_call.1} parent=1 // pred_fallthru
      _
    // Predicated region
    $region10: #{tpu_custom_call.1} parent=1 // pred_check
      _
    $region11: #{tpu_custom_call.1} parent=1 // pred_check_branch
      %18 = sbr.rel (0) target = $region13
    $region12: #{tpu_custom_call.1} parent=1 // pred_region
      _
    $region13: #{tpu_custom_call.1} parent=1 // pred_fallthru
      _
    // Predicated region
    $region14: #{tpu_custom_call.1} parent=1 // pred_check
      _
    $region15: #{tpu_custom_call.1} parent=1 // pred_check_branch
      %20 = sbr.rel (0) target = $region17
    $region16: #{tpu_custom_call.1} parent=1 // pred_region
      _
    $region17: #{tpu_custom_call.1} parent=1 // pred_fallthru
      _
    // Predicated region
    $region18: #{tpu_custom_call.1} parent=1 // pred_check
      _
    $region19: #{tpu_custom_call.1} parent=1 // pred_check_branch
      %22 = sbr.rel (0) target = $region21
    $region20: #{tpu_custom_call.1} parent=1 // pred_region
      _
    $region21: #{tpu_custom_call.1} parent=1 // pred_fallthru
      _
    %v23 = vld [vmem:[%s0] sm:$0xff]
    %v24 = vld [vmem:[%s0 + $0x8] sm:$0xff]
    %v25 = vld [vmem:[%s0 + $0x10] sm:$0xff]
    %v26 = vld [vmem:[%s0 + $0x18] sm:$0xff]
    %v27 = vld [vmem:[%s0 + $0x20] sm:$0xff]
    %v28 = vld [vmem:[%s0 + $0x28] sm:$0xff]
    %v29 = vld [vmem:[%s0 + $0x30] sm:$0xff]
    %v30 = vld [vmem:[%s0 + $0x38] sm:$0xff]
    %v31 = vld [vmem:[%s0 + $0x40] sm:$0xff]
    %v32 = vld [vmem:[%s0 + $0x48] sm:$0xff]
    %v33 = vld [vmem:[%s0 + $0x50] sm:$0xff]
    %v34 = vld [vmem:[%s0 + $0x58] sm:$0xff]
    %v35 = vld [vmem:[%s0 + $0x60] sm:$0xff]
    %v36 = vld [vmem:[%s0 + $0x68] sm:$0xff]
    %v37 = vld [vmem:[%s0 + $0x70] sm:$0xff]
    %v38 = vld [vmem:[%s0 + $0x78] sm:$0xff]
    %v39 = vld [vmem:[%s1] sm:$0xff]
    %v40 = vld [vmem:[%s1 + $0x8] sm:$0xff]
    %v41 = vld [vmem:[%s1 + $0x10] sm:$0xff]
    %v42 = vld [vmem:[%s1 + $0x18] sm:$0xff]
    %v43 = vld [vmem:[%s2] sm:$0x1]
    %v45 = vperm.slane %v43, 0
    %vm47 = vcmask 261120
    %v49 = vsel %vm47, %v23, 0
    %v52 = vsel %vm47, %v24, 0
    %v55 = vsel %vm47, %v25, 0
    %v58 = vsel %vm47, %v26, 0
    %v61 = vsel %vm47, %v27, 0
    %v64 = vsel %vm47, %v28, 0
    %v67 = vsel %vm47, %v29, 0
    %v70 = vsel %vm47, %v30, 0
    %v73 = vsel %vm47, %v31, 0
    %v76 = vsel %vm47, %v32, 0
    %v79 = vsel %vm47, %v33, 0
    %v82 = vsel %vm47, %v34, 0
    %v85 = vsel %vm47, %v35, 0
    %v88 = vsel %vm47, %v36, 0
    %v91 = vsel %vm47, %v37, 0
    %v94 = vsel %vm47, %v38, 0
    %96 = vmatpush.msra.mxu0 0.0
    %97 = vmatpush.msra.mxu0 0.0
    %98 = vmatpush.msra.mxu0 0.0
    %99 = vmatpush.msra.mxu0 0.0
    %100 = vmatpush.msra.mxu0 0.0
    %101 = vmatpush.msra.mxu0 0.0
    %102 = vmatpush.msra.mxu0 0.0
    %103 = vmatpush.msra.mxu0 0.0
    %104 = vmatpush.msra.mxu0 0.0
    %105 = vmatpush.msra.mxu0 0.0
    %106 = vmatpush.msra.mxu0 0.0
    %107 = vmatpush.msra.mxu0 0.0
    %108 = vmatpush.msra.mxu0 %v42
    %109 = vmatpush.msra.mxu0 %v41
    %110 = vmatpush.msra.mxu0 %v40
    %111 = vmatpush.msra.mxu0 %v39
    %112 = vmatmul.f32.gmra.mxu0 %v49
    %v113 = vpop.f32.mrf.mxu0
    %v114 = vadd.f32 %v45, %v113
    %115 = vmatmul.f32.gmra.mxu0 %v52
    %v116 = vpop.f32.mrf.mxu0
    %v117 = vadd.f32 %v45, %v116
    %118 = vmatmul.f32.gmra.mxu0 %v55
    %v119 = vpop.f32.mrf.mxu0
    %v120 = vadd.f32 %v45, %v119
    %121 = vmatmul.f32.gmra.mxu0 %v58
    %v122 = vpop.f32.mrf.mxu0
    %v123 = vadd.f32 %v45, %v122
    %124 = vmatmul.f32.gmra.mxu0 %v61
    %v125 = vpop.f32.mrf.mxu0
    %v126 = vadd.f32 %v45, %v125
    %127 = vmatmul.f32.gmra.mxu0 %v64
    %v128 = vpop.f32.mrf.mxu0
    %v129 = vadd.f32 %v45, %v128
    %130 = vmatmul.f32.gmra.mxu0 %v67
    %v131 = vpop.f32.mrf.mxu0
    %v132 = vadd.f32 %v45, %v131
    %133 = vmatmul.f32.gmra.mxu0 %v70
    %v134 = vpop.f32.mrf.mxu0
    %v135 = vadd.f32 %v45, %v134
    %136 = vmatmul.f32.gmra.mxu0 %v73
    %v137 = vpop.f32.mrf.mxu0
    %v138 = vadd.f32 %v45, %v137
    %139 = vmatmul.f32.gmra.mxu0 %v76
    %v140 = vpop.f32.mrf.mxu0
    %v141 = vadd.f32 %v45, %v140
    %142 = vmatmul.f32.gmra.mxu0 %v79
    %v143 = vpop.f32.mrf.mxu0
    %v144 = vadd.f32 %v45, %v143
    %145 = vmatmul.f32.gmra.mxu0 %v82
    %v146 = vpop.f32.mrf.mxu0
    %v147 = vadd.f32 %v45, %v146
    %148 = vmatmul.f32.gmra.mxu0 %v85
    %v149 = vpop.f32.mrf.mxu0
    %v150 = vadd.f32 %v45, %v149
    %151 = vmatmul.f32.gmra.mxu0 %v88
    %v152 = vpop.f32.mrf.mxu0
    %v153 = vadd.f32 %v45, %v152
    %154 = vmatmul.f32.gmra.mxu0 %v91
    %v155 = vpop.f32.mrf.mxu0
    %v156 = vadd.f32 %v45, %v155
    %157 = vmatmul.f32.gmra.mxu0 %v94
    %v158 = vpop.f32.mrf.mxu0
    %v159 = vadd.f32 %v45, %v158
    %160 = vdwg.mxu0
    %v161 = vmax.f32 %v114, 0.0
    %v162 = vmax.f32 %v117, 0.0
    %v163 = vmax.f32 %v120, 0.0
    %v164 = vmax.f32 %v123, 0.0
    %v165 = vmax.f32 %v126, 0.0
    %v166 = vmax.f32 %v129, 0.0
    %v167 = vmax.f32 %v132, 0.0
    %v168 = vmax.f32 %v135, 0.0
    %v169 = vmax.f32 %v138, 0.0
    %v170 = vmax.f32 %v141, 0.0
    %v171 = vmax.f32 %v144, 0.0
    %v172 = vmax.f32 %v147, 0.0
    %v173 = vmax.f32 %v150, 0.0
    %v174 = vmax.f32 %v153, 0.0
    %v175 = vmax.f32 %v156, 0.0
    %v176 = vmax.f32 %v159, 0.0
    %v177 = vld [vmem:[%s3] sm:$0x1]
    %v178 = vld [vmem:[#allocation2] sm:$0x1]
    %180 = vset.pattern.permute.xlu0 0
    %181 = vperm.xlu0 %180, %v178
    %v182 = vpop.permute.xlu0 %181
    %v184 = vperm.slane %v182, 0
    %vm185 = vcmask 523264
    %v187 = vsel %vm185, %v177, 0
    %v190 = vsel %vm185, %v161, 0
    %v193 = vsel %vm185, %v162, 0
    %v196 = vsel %vm185, %v163, 0
    %v199 = vsel %vm185, %v164, 0
    %v202 = vsel %vm185, %v165, 0
    %v205 = vsel %vm185, %v166, 0
    %v208 = vsel %vm185, %v167, 0
    %v211 = vsel %vm185, %v168, 0
    %v214 = vsel %vm185, %v169, 0
    %v217 = vsel %vm185, %v170, 0
    %v220 = vsel %vm185, %v171, 0
    %v223 = vsel %vm185, %v172, 0
    %v226 = vsel %vm185, %v173, 0
    %v229 = vsel %vm185, %v174, 0
    %v232 = vsel %vm185, %v175, 0
    %v235 = vsel %vm185, %v176, 0
    %237 = vmatpush.xpose.msra.mxu0 %v235
    %238 = vmatpush.xpose.msra.mxu0 %v232
    %239 = vmatpush.xpose.msra.mxu0 %v229
    %240 = vmatpush.xpose.msra.mxu0 %v226
    %241 = vmatpush.xpose.msra.mxu0 %v223
    %242 = vmatpush.xpose.msra.mxu0 %v220
    %243 = vmatpush.xpose.msra.mxu0 %v217
    %244 = vmatpush.xpose.msra.mxu0 %v214
    %245 = vmatpush.xpose.msra.mxu0 %v211
    %246 = vmatpush.xpose.msra.mxu0 %v208
    %247 = vmatpush.xpose.msra.mxu0 %v205
    %248 = vmatpush.xpose.msra.mxu0 %v202
    %249 = vmatpush.xpose.msra.mxu0 %v199
    %250 = vmatpush.xpose.msra.mxu0 %v196
    %251 = vmatpush.xpose.msra.mxu0 %v193
    %252 = vmatpush.xpose.msra.mxu0 %v190
    %253 = vmatmul.f32.gmra.mxu0 %v187
    %v254 = vpop.f32.mrf.mxu0
    %v255 = vadd.f32 %v184, %v254
    %256 = vdwg.mxu0
    %v257 = vsub.f32 0.0, %v255
    %v258 = vmul.f32 %v257, 1.442695
    %v259 = vpow.pop %v258
    %v260 = vadd.f32 %v259, 1.0
    %v261 = vrcp.pop %v260
    %v262 = vmul.f32 %v260, %v261
    %v263 = vsub.f32 1.0, %v262
    %v264 = vmul.f32 %v261, %v263
    %v265 = vadd.f32 %v261, %v264
    %vm266 = vweird.f32 %v260
    %vm267 = vweird.f32 %v261
    %vm268 = vmor %vm266, %vm267
    %v269 = vsel %vm268, %v261, %v265
    %v270 = vand.u32 2147483647, %v260
    %vm271 = vcmp.eq.f32.partialorder %v270, 8.507059e+37
    %v272 = vand.u32 %v260, 2147483648
    %v273 = vor.u32 1.1754944e-38, %v272
    %v274 = vsel %vm271, %v273, %v269
    %v275 = vmul.f32 1.0, %v274
    %276 = vst [vmem:[#allocation3] sm:$0x1] %v275
    // Predicated region
    $region22: #{tpu_custom_call.1} parent=1 // pred_check
      _
    $region23: #{tpu_custom_call.1} parent=1 // pred_check_branch
      %278 = sbr.rel (0) target = $region25
    $region24: #{tpu_custom_call.1} parent=1 // pred_region
      %280 = vsyncadd [#allocation4], 0
      %s282 = sshll.u32 [#allocation3], 4
      %s283 = int_to_ptr.vmem [resolvable:$true] %s282
      %s284 = sshll.u32 %s5, 4
      %s285 = int_to_ptr.hbm [resolvable:$true] %s284
      %287 = dma.vmem_to_hbm [thread:$0]  %s283, 16, %s285, [#allocation4]
    $region25: #{tpu_custom_call.1} parent=1 // pred_fallthru
      _
    // Predicated region
    $region26: #{tpu_custom_call.1} parent=1 // pred_check
      _
    $region27: #{tpu_custom_call.1} parent=1 // pred_check_branch
      %289 = sbr.rel (0) target = $region29
    $region28: #{tpu_custom_call.1} parent=1 // pred_region
      %291 = dma.done [#allocation4], 16
    $region29: #{tpu_custom_call.1} parent=1 // pred_fallthru
      _
    %292 = vsyncpa [#allocation4], 1

</llo_original>
